<compile_context>
chip_gen: v7x
topology: tpu7x:2x2x1
jax: 0.10.0
libtpu: 0.0.40
codegen_flags: <defaults>
</compile_context>

<pallas_src>
import jax
import jax.numpy as jnp
from jax.experimental import pallas as pl
from jax.experimental.pallas import tpu as pltpu


def _round_up(x, m):
    return ((x + m - 1) // m) * m


def conv1x1_bias_relu_kernel(x_ref, w_ref, b_ref, o_ref):
    # x_ref: (1, Cin, TM)   w_ref: (Cout, Cin)   b_ref: (Cout, 1)
    # o_ref: (1, Cout, TM)
    y = jnp.dot(w_ref[...], x_ref[0], preferred_element_type=jnp.float32)
    y = y + b_ref[...]                           # bias broadcast over lanes
    o_ref[0] = jnp.maximum(y, 0.0).astype(o_ref.dtype)


def conv2d_1x1_relu(x_nchw, weight, bias, *, vmem_budget_bytes=12 * 1024 * 1024):
    """x_nchw: (N, Cin, H, W); weight: (Cout, Cin, 1, 1); bias: (Cout,)."""
    N, Cin, H, W = x_nchw.shape
    Cout = weight.shape[0]
    HW = H * W
    itemsize = jnp.dtype(x_nchw.dtype).itemsize

    w2d = weight.reshape(Cout, Cin)
    b2d = bias.reshape(Cout, 1)

    # ---- layout: fold batch onto the pixel/lane axis when it is free (N == 1,
    # pure reshape) or when per-image HW would waste most of the 128 lanes.
    fold = (N == 1) or (HW < 128)
    x3d = x_nchw.reshape(N, Cin, HW)
    if fold:
        if N > 1:
            x3d = jnp.transpose(x3d, (1, 0, 2)).reshape(1, Cin, N * HW)
        B, P = 1, N * HW
    else:
        B, P = N, HW

    # ---- pixel tile from a VMEM budget: double-buffered activation + output
    # tiles plus (conservatively double-buffered) resident weights/bias.
    resident = 2 * (Cout * Cin + Cout) * itemsize
    per_col = 2 * (Cin + Cout) * itemsize
    tm_fit = max(128, ((vmem_budget_bytes - resident) // per_col) // 128 * 128)

    if _round_up(P, 128) <= tm_fit:
        if B == 1 and P >= 256:
            # Two pixel tiles so both v7x TensorCores get a share of the work.
            TM = _round_up(pl.cdiv(P, 2), 128)
        else:
            TM = P                     # block == full extent, single tile
    else:
        TM = tm_fit                    # tail tile masked by Pallas

    grid = (B, pl.cdiv(P, TM))

    out = pl.pallas_call(
        conv1x1_bias_relu_kernel,
        out_shape=jax.ShapeDtypeStruct((B, Cout, P), x_nchw.dtype),
        grid=grid,
        in_specs=[
            pl.BlockSpec((1, Cin, TM), lambda n, i: (n, 0, i)),   # activations
            pl.BlockSpec((Cout, Cin), lambda n, i: (0, 0)),        # weights
            pl.BlockSpec((Cout, 1), lambda n, i: (0, 0)),          # bias
        ],
        out_specs=pl.BlockSpec((1, Cout, TM), lambda n, i: (n, 0, i)),
        compiler_params=pltpu.CompilerParams(
            dimension_semantics=("parallel", "parallel")),
    )(x3d, w2d, b2d)

    # Unfold back to NCHW (pure reshapes; transpose only for the folded N>1 case).
    if fold and N > 1:
        out = out.reshape(Cout, N, HW).transpose(1, 0, 2)
    return out.reshape(N, Cout, H, W)


if __name__ == "__main__":
    key = jax.random.PRNGKey(0)
    kx, kw, kb, kx2 = jax.random.split(key, 4)

    # Shape implied by the module: x336 = (1, 336, 1, 1); Conv2d(336 -> 84, 1x1) + ReLU.
    N, Cin, Cout, Hs, Ws = 1, 336, 84, 1, 1
    fan_in = Cin * 1 * 1
    bound = 1.0 / (fan_in ** 0.5)
    weight = jax.random.uniform(kw, (Cout, Cin, 1, 1), minval=-bound,
                                maxval=bound, dtype=jnp.float32)
    bias = jax.random.uniform(kb, (Cout,), minval=-bound, maxval=bound,
                              dtype=jnp.float32)

    def ref(x):
        y = jnp.einsum('nchw,oc->nohw', x, weight.reshape(Cout, Cin))
        return jnp.maximum(y + bias.reshape(1, Cout, 1, 1), 0.0)

    # 1) The module's exact shape (tiny-spatial fast path, batch folded onto lanes).
    x = jax.random.normal(kx, (N, Cin, Hs, Ws), dtype=jnp.float32)
    out = conv2d_1x1_relu(x, weight, bias)
    jax.block_until_ready(out)
    assert out.shape == (N, Cout, Hs, Ws)
    assert jnp.allclose(out, ref(x), atol=1e-5, rtol=1e-5)

    # 2) Non-multiple-of-128 spatial size: exercises the masked partial tail tile
    #    (no wrapper-side padding or slicing anywhere).
    x2 = jax.random.normal(kx2, (1, Cin, 24, 24), dtype=jnp.float32)
    out2 = conv2d_1x1_relu(x2, weight, bias)
    jax.block_until_ready(out2)
    assert out2.shape == (1, Cout, 24, 24)
    assert jnp.allclose(out2, ref(x2), atol=1e-4, rtol=1e-4)

    print("KERNEL_OK")
</pallas_src>

<mosaic_0001>
module attributes {stable_mosaic.version = 11 : i64} {
  func.func @conv1x1_bias_relu_kernel(%arg0: i32, %arg1: i32, %arg2: memref<1x336x1xf32, #tpu.memory_space<vmem>>, %arg3: memref<84x336xf32, #tpu.memory_space<vmem>>, %arg4: memref<84x1xf32, #tpu.memory_space<vmem>>, %arg5: memref<1x84x1xf32, #tpu.memory_space<vmem>>) attributes {dimension_semantics = [#tpu.dimension_semantics<parallel>, #tpu.dimension_semantics<parallel>], iteration_bounds = array<i64: 1, 1>, scalar_prefetch = 0 : i64, scratch_operands = 0 : i64, tpu.core_type = #tpu.core_type<tc>, window_params = [{transform_indices = @transform_0, window_bounds = array<i64: 1, 336, 1>}, {pipeline_mode = #tpu.pipeline_mode<synchronous>, transform_indices = @transform_1, window_bounds = array<i64: 84, 336>}, {pipeline_mode = #tpu.pipeline_mode<synchronous>, transform_indices = @transform_2, window_bounds = array<i64: 84, 1>}, {transform_indices = @transform_3, window_bounds = array<i64: 1, 84, 1>}]} {
    %c0 = arith.constant 0 : index
    %c0_0 = arith.constant 0 : index
    %0 = vector.load %arg3[%c0, %c0_0] : memref<84x336xf32, #tpu.memory_space<vmem>>, vector<84x336xf32>
    %c0_1 = arith.constant 0 : index
    %c0_2 = arith.constant 0 : index
    %c0_3 = arith.constant 0 : index
    %1 = vector.load %arg2[%c0_1, %c0_2, %c0_3] : memref<1x336x1xf32, #tpu.memory_space<vmem>>, vector<1x336x1xf32>
    %2 = vector.shape_cast %1 : vector<1x336x1xf32> to vector<336x1xf32>
    %cst = arith.constant dense<0.000000e+00> : vector<84x1xf32>
    %3 = tpu.matmul %0, %2, %cst {dimension_numbers = #tpu.dot_dimension_numbers<[1], [0], [0], [1], [0, 0, 1, 1], [], []>} : vector<84x336xf32>, vector<336x1xf32>, vector<84x1xf32> -> vector<84x1xf32>
    %c0_4 = arith.constant 0 : index
    %c0_5 = arith.constant 0 : index
    %4 = vector.load %arg4[%c0_4, %c0_5] : memref<84x1xf32, #tpu.memory_space<vmem>>, vector<84x1xf32>
    %5 = arith.addf %3, %4 : vector<84x1xf32>
    %cst_6 = arith.constant 0.000000e+00 : f32
    %6 = vector.broadcast %cst_6 : f32 to vector<84x1xf32>
    %7 = arith.maximumf %5, %6 : vector<84x1xf32>
    %c0_7 = arith.constant 0 : index
    %c0_8 = arith.constant 0 : index
    %c0_9 = arith.constant 0 : index
    %8 = vector.load %arg5[%c0_7, %c0_8, %c0_9] : memref<1x84x1xf32, #tpu.memory_space<vmem>>, vector<1x84x1xf32>
    %9 = vector.shape_cast %8 : vector<1x84x1xf32> to vector<84x1xf32>
    %10 = vector.shape_cast %7 : vector<84x1xf32> to vector<1x84x1xf32>
    tpu.vector_store %arg5[%c0_7, %c0_8, %c0_9], %10 {strides = array<i32>} : memref<1x84x1xf32, #tpu.memory_space<vmem>>, vector<1x84x1xf32>,
    return
  }
  func.func @transform_0(%arg0: i32, %arg1: i32) -> (i32, i32, i32) {
    %c0_i32 = arith.constant 0 : i32
    %c0_i32_0 = arith.constant 0 : i32
    return %arg0, %c0_i32, %arg1 : i32, i32, i32
  }
  func.func @transform_1(%arg0: i32, %arg1: i32) -> (i32, i32) {
    %c0_i32 = arith.constant 0 : i32
    %c0_i32_0 = arith.constant 0 : i32
    %c0_i32_1 = arith.constant 0 : i32
    return %c0_i32, %c0_i32_0 : i32, i32
  }
  func.func @transform_2(%arg0: i32, %arg1: i32) -> (i32, i32) {
    %c0_i32 = arith.constant 0 : i32
    %c0_i32_0 = arith.constant 0 : i32
    %c0_i32_1 = arith.constant 0 : i32
    return %c0_i32, %c0_i32_0 : i32, i32
  }
  func.func @transform_3(%arg0: i32, %arg1: i32) -> (i32, i32, i32) {
    %c0_i32 = arith.constant 0 : i32
    %c0_i32_0 = arith.constant 0 : i32
    return %arg0, %c0_i32, %arg1 : i32, i32, i32
  }
}

</mosaic_0001>

<llo_original>
// kernel: tpu_custom_call.1
$region0: #{tpu_custom_call.1}
  #allocation0 [shape = 'u32[]', space=smem, size = 0x4, offset = 0x4, fixed_abs, tag = 'smem constant byte address 0x4 - core index']
  #allocation1 [shape = 'u32[144,128]{1,0:T(1,128)}', space=vmem, size = 0x12000, scoped, tag = 'internal scratch']
  %s0 = inlined_call_operand.vmem [shape: f32[1,336,1], index: 0, kind: input, shape index: {}]
  %s1 = inlined_call_operand.vmem [shape: f32[84,336], index: 1, kind: input, shape index: {}]
  %s2 = inlined_call_operand.vmem [shape: f32[84,1], index: 2, kind: input, shape index: {}]
  %s3 = inlined_call_operand.vmem [shape: f32[1,84,1], index: 3, kind: output, shape index: {}]
  %s4 = sld [smem:[#allocation0]]
  $region22: #{tpu_custom_call.1} parent=0
    _
  %s6 = ssub.s32 1, %s4
  %s7 = scalar_select 0, %s6, %s4
  // Predicated region
  $region2: #{tpu_custom_call.1} parent=0 // pred_check
    _
  $region3: #{tpu_custom_call.1} parent=0 // pred_check_branch
    %9 = sbr.rel (0) target = $region5
  $region4: #{tpu_custom_call.1} parent=0 // pred_region
    _
  $region5: #{tpu_custom_call.1} parent=0 // pred_fallthru
    _
  // Predicated region
  $region6: #{tpu_custom_call.1} parent=0 // pred_check
    _
  $region7: #{tpu_custom_call.1} parent=0 // pred_check_branch
    %11 = sbr.rel (0) target = $region9
  $region8: #{tpu_custom_call.1} parent=0 // pred_region
    _
  $region9: #{tpu_custom_call.1} parent=0 // pred_fallthru
    _
  // Predicated region
  $region10: #{tpu_custom_call.1} parent=0 // pred_check
    _
  $region11: #{tpu_custom_call.1} parent=0 // pred_check_branch
    %13 = sbr.rel (0) target = $region13
  $region12: #{tpu_custom_call.1} parent=0 // pred_region
    _
  $region13: #{tpu_custom_call.1} parent=0 // pred_fallthru
    _
  %v14 = vld [vmem:[%s1] sm:$0xff]
  %v15 = vld [vmem:[%s1 + $0x8] sm:$0xff]
  %v16 = vld [vmem:[%s1 + $0x10] sm:$0xff]
  %v17 = vld [vmem:[%s1 + $0x18] sm:$0xff]
  %v18 = vld [vmem:[%s1 + $0x20] sm:$0xff]
  %v19 = vld [vmem:[%s1 + $0x28] sm:$0xff]
  %v20 = vld [vmem:[%s1 + $0x30] sm:$0xff]
  %v21 = vld [vmem:[%s1 + $0x38] sm:$0xff]
  %v22 = vld [vmem:[%s1 + $0x40] sm:$0xff]
  %v23 = vld [vmem:[%s1 + $0x48] sm:$0xff]
  %v24 = vld [vmem:[%s1 + $0x50] sm:$0xff]
  %v25 = vld [vmem:[%s1 + $0x58] sm:$0xff]
  %v26 = vld [vmem:[%s1 + $0x60] sm:$0xff]
  %v27 = vld [vmem:[%s1 + $0x68] sm:$0xff]
  %v28 = vld [vmem:[%s1 + $0x70] sm:$0xff]
  %v29 = vld [vmem:[%s1 + $0x78] sm:$0xff]
  %v30 = vld [vmem:[%s1 + $0x80] sm:$0xff]
  %v31 = vld [vmem:[%s1 + $0x88] sm:$0xff]
  %v32 = vld [vmem:[%s1 + $0x90] sm:$0xff]
  %v33 = vld [vmem:[%s1 + $0x98] sm:$0xff]
  %v34 = vld [vmem:[%s1 + $0xa0] sm:$0xff]
  %v35 = vld [vmem:[%s1 + $0xa8] sm:$0xff]
  %v36 = vld [vmem:[%s1 + $0xb0] sm:$0xff]
  %v37 = vld [vmem:[%s1 + $0xb8] sm:$0xff]
  %v38 = vld [vmem:[%s1 + $0xc0] sm:$0xff]
  %v39 = vld [vmem:[%s1 + $0xc8] sm:$0xff]
  %v40 = vld [vmem:[%s1 + $0xd0] sm:$0xff]
  %v41 = vld [vmem:[%s1 + $0xd8] sm:$0xff]
  %v42 = vld [vmem:[%s1 + $0xe0] sm:$0xff]
  %v43 = vld [vmem:[%s1 + $0xe8] sm:$0xff]
  %v44 = vld [vmem:[%s1 + $0xf0] sm:$0xf]
  %v45 = vld [vmem:[%s1 + $0xf8] sm:$0xf]
  %v46 = vld [vmem:[%s1 + $0x100] sm:$0xf]
  %v47 = vld [vmem:[%s0] sm:$0xff]
  %v48 = vld [vmem:[%s0 + $0x8] sm:$0xff]
  %v49 = vld [vmem:[%s0 + $0x10] sm:$0xff]
  %v50 = vld [vmem:[%s0 + $0x18] sm:$0xff]
  %v51 = vld [vmem:[%s0 + $0x20] sm:$0xff]
  %v52 = vld [vmem:[%s0 + $0x28] sm:$0xff]
  %v53 = vld [vmem:[%s0 + $0x30] sm:$0xff]
  %v54 = vld [vmem:[%s0 + $0x38] sm:$0xff]
  %v55 = vld [vmem:[%s0 + $0x40] sm:$0xff]
  %v56 = vld [vmem:[%s0 + $0x48] sm:$0xff]
  %v57 = vld [vmem:[%s0 + $0x50] sm:$0xff]
  %v58 = vld [vmem:[%s0 + $0x58] sm:$0xff]
  %v59 = vld [vmem:[%s0 + $0x60] sm:$0xff]
  %v60 = vld [vmem:[%s0 + $0x68] sm:$0xff]
  %v61 = vld [vmem:[%s0 + $0x70] sm:$0xff]
  %v62 = vld [vmem:[%s0 + $0x78] sm:$0xff]
  %v63 = vld [vmem:[%s0 + $0x80] sm:$0xff]
  %v64 = vld [vmem:[%s0 + $0x88] sm:$0xff]
  %v65 = vld [vmem:[%s0 + $0x90] sm:$0xff]
  %v66 = vld [vmem:[%s0 + $0x98] sm:$0xff]
  %v67 = vld [vmem:[%s0 + $0xa0] sm:$0xff]
  %v68 = vld [vmem:[%s0 + $0xa8] sm:$0xff]
  %v69 = vld [vmem:[%s0 + $0xb0] sm:$0xff]
  %v70 = vld [vmem:[%s0 + $0xb8] sm:$0xff]
  %v71 = vld [vmem:[%s0 + $0xc0] sm:$0xff]
  %v72 = vld [vmem:[%s0 + $0xc8] sm:$0xff]
  %v73 = vld [vmem:[%s0 + $0xd0] sm:$0xff]
  %v74 = vld [vmem:[%s0 + $0xd8] sm:$0xff]
  %v75 = vld [vmem:[%s0 + $0xe0] sm:$0xff]
  %v76 = vld [vmem:[%s0 + $0xe8] sm:$0xff]
  %v77 = vld [vmem:[%s0 + $0xf0] sm:$0xff]
  %v78 = vld [vmem:[%s0 + $0xf8] sm:$0xff]
  %v79 = vld [vmem:[%s0 + $0x100] sm:$0xff]
  %v80 = vld [vmem:[%s0 + $0x108] sm:$0xff]
  %v81 = vld [vmem:[%s0 + $0x110] sm:$0xff]
  %v82 = vld [vmem:[%s0 + $0x118] sm:$0xff]
  %v83 = vld [vmem:[%s0 + $0x120] sm:$0xff]
  %v84 = vld [vmem:[%s0 + $0x128] sm:$0xff]
  %v85 = vld [vmem:[%s0 + $0x130] sm:$0xff]
  %v86 = vld [vmem:[%s0 + $0x138] sm:$0xff]
  %v87 = vld [vmem:[%s0 + $0x140] sm:$0xff]
  %v88 = vld [vmem:[%s0 + $0x148] sm:$0xff]
  %v89 = vld [vmem:[%s2] sm:$0xff]
  %v90 = vld [vmem:[%s2 + $0x8] sm:$0xff]
  %v91 = vld [vmem:[%s2 + $0x10] sm:$0xff]
  %v92 = vld [vmem:[%s2 + $0x18] sm:$0xff]
  %v93 = vld [vmem:[%s2 + $0x20] sm:$0xff]
  %v94 = vld [vmem:[%s2 + $0x28] sm:$0xff]
  %v95 = vld [vmem:[%s2 + $0x30] sm:$0xff]
  %v96 = vld [vmem:[%s2 + $0x38] sm:$0xff]
  %v97 = vld [vmem:[%s2 + $0x40] sm:$0xff]
  %v98 = vld [vmem:[%s2 + $0x48] sm:$0xff]
  %v99 = vld [vmem:[%s2 + $0x50] sm:$0xf]
  %vm100 = vcmask 654336
  %v102 = vsel %vm100, %v16, 0
  %v105 = vsel %vm100, %v19, 0
  %v108 = vsel %vm100, %v22, 0
  %v111 = vsel %vm100, %v25, 0
  %v114 = vsel %vm100, %v28, 0
  %v117 = vsel %vm100, %v31, 0
  %v120 = vsel %vm100, %v34, 0
  %v123 = vsel %vm100, %v37, 0
  %v126 = vsel %vm100, %v40, 0
  %v129 = vsel %vm100, %v43, 0
  %v132 = vsel %vm100, %v46, 0
  %134 = vmatprep.subr.mxu0 0.0
  %135 = vmatpush1.msra.mxu0 %v47
  %136 = vmatprep.subr.mxu0 0.0
  %137 = vmatpush1.msra.mxu0 %v48
  %138 = vmatprep.subr.mxu0 0.0
  %139 = vmatpush1.msra.mxu0 %v49
  %140 = vmatprep.subr.mxu0 0.0
  %141 = vmatpush1.msra.mxu0 %v50
  %142 = vmatprep.subr.mxu0 0.0
  %143 = vmatpush1.msra.mxu0 %v51
  %144 = vmatprep.subr.mxu0 0.0
  %145 = vmatpush1.msra.mxu0 %v52
  %146 = vmatprep.subr.mxu0 0.0
  %147 = vmatpush1.msra.mxu0 %v53
  %148 = vmatprep.subr.mxu0 0.0
  %149 = vmatpush1.msra.mxu0 %v54
  %150 = vmatprep.subr.mxu0 0.0
  %151 = vmatpush1.msra.mxu0 %v55
  %152 = vmatprep.subr.mxu0 0.0
  %153 = vmatpush1.msra.mxu0 %v56
  %154 = vmatprep.subr.mxu0 0.0
  %155 = vmatpush1.msra.mxu0 %v57
  %156 = vmatprep.subr.mxu0 0.0
  %157 = vmatpush1.msra.mxu0 %v58
  %158 = vmatprep.subr.mxu0 0.0
  %159 = vmatpush1.msra.mxu0 %v59
  %160 = vmatprep.subr.mxu0 0.0
  %161 = vmatpush1.msra.mxu0 %v60
  %162 = vmatprep.subr.mxu0 0.0
  %163 = vmatpush1.msra.mxu0 %v61
  %164 = vmatprep.subr.mxu0 0.0
  %165 = vmatpush1.msra.mxu0 %v62
  %166 = vmatprep.subr.mxu0 0.0
  %167 = vmatpush1.msra.mxu0 %v63
  %168 = vmatprep.subr.mxu0 0.0
  %169 = vmatpush1.msra.mxu0 %v64
  %170 = vmatprep.subr.mxu0 0.0
  %171 = vmatpush1.msra.mxu0 %v65
  %172 = vmatprep.subr.mxu0 0.0
  %173 = vmatpush1.msra.mxu0 %v66
  %174 = vmatprep.subr.mxu0 0.0
  %175 = vmatpush1.msra.mxu0 %v67
  %176 = vmatprep.subr.mxu0 0.0
  %177 = vmatpush1.msra.mxu0 %v68
  %178 = vmatprep.subr.mxu0 0.0
  %179 = vmatpush1.msra.mxu0 %v69
  %180 = vmatprep.subr.mxu0 0.0
  %181 = vmatpush1.msra.mxu0 %v70
  %182 = vmatprep.subr.mxu0 0.0
  %183 = vmatpush1.msra.mxu0 %v71
  %184 = vmatprep.subr.mxu0 0.0
  %185 = vmatpush1.msra.mxu0 %v72
  %186 = vmatprep.subr.mxu0 0.0
  %187 = vmatpush1.msra.mxu0 %v73
  %188 = vmatprep.subr.mxu0 0.0
  %189 = vmatpush1.msra.mxu0 %v74
  %190 = vmatprep.subr.mxu0 0.0
  %191 = vmatpush1.msra.mxu0 %v75
  %192 = vmatprep.subr.mxu0 0.0
  %193 = vmatpush1.msra.mxu0 %v76
  %194 = vmatprep.subr.mxu0 0.0
  %195 = vmatpush1.msra.mxu0 %v77
  %196 = vmatprep.subr.mxu0 0.0
  %197 = vmatpush1.msra.mxu0 %v78
  %198 = vmatprep.mubr.f32.mxu0 %v15
  %199 = vmatmul.mubr.f32.gmra.mrb[0].mxu0 %v14
  %v200 = vpop.f32.mrb[0].mxu0
  %v201 = vadd.f32 %v89, %v200
  %v202 = vpop.f32.mrb[0].mxu0
  %203 = vmatprep.mubr.f32.mxu0 %v18
  %204 = vmatmul.mubr.f32.gmra.mrb[0].mxu0 %v17
  %v205 = vpop.f32.mrb[0].mxu0
  %v206 = vadd.f32 %v90, %v205
  %v207 = vpop.f32.mrb[0].mxu0
  %208 = vmatprep.mubr.f32.mxu0 %v21
  %209 = vmatmul.mubr.f32.gmra.mrb[0].mxu0 %v20
  %v210 = vpop.f32.mrb[0].mxu0
  %v211 = vadd.f32 %v91, %v210
  %v212 = vpop.f32.mrb[0].mxu0
  %213 = vmatprep.mubr.f32.mxu0 %v24
  %214 = vmatmul.mubr.f32.gmra.mrb[0].mxu0 %v23
  %v215 = vpop.f32.mrb[0].mxu0
  %v216 = vadd.f32 %v92, %v215
  %v217 = vpop.f32.mrb[0].mxu0
  %218 = vmatprep.mubr.f32.mxu0 %v27
  %219 = vmatmul.mubr.f32.gmra.mrb[0].mxu0 %v26
  %v220 = vpop.f32.mrb[0].mxu0
  %v221 = vadd.f32 %v93, %v220
  %v222 = vpop.f32.mrb[0].mxu0
  %223 = vmatprep.mubr.f32.mxu0 %v30
  %224 = vmatmul.mubr.f32.gmra.mrb[0].mxu0 %v29
  %v225 = vpop.f32.mrb[0].mxu0
  %v226 = vadd.f32 %v94, %v225
  %v227 = vpop.f32.mrb[0].mxu0
  %228 = vmatprep.mubr.f32.mxu0 %v33
  %229 = vmatmul.mubr.f32.gmra.mrb[0].mxu0 %v32
  %v230 = vpop.f32.mrb[0].mxu0
  %v231 = vadd.f32 %v95, %v230
  %v232 = vpop.f32.mrb[0].mxu0
  %233 = vmatprep.mubr.f32.mxu0 %v36
  %234 = vmatmul.mubr.f32.gmra.mrb[0].mxu0 %v35
  %v235 = vpop.f32.mrb[0].mxu0
  %v236 = vadd.f32 %v96, %v235
  %v237 = vpop.f32.mrb[0].mxu0
  %238 = vmatprep.mubr.f32.mxu0 %v39
  %239 = vmatmul.mubr.f32.gmra.mrb[0].mxu0 %v38
  %v240 = vpop.f32.mrb[0].mxu0
  %v241 = vadd.f32 %v97, %v240
  %v242 = vpop.f32.mrb[0].mxu0
  %243 = vmatprep.mubr.f32.mxu0 %v42
  %244 = vmatmul.mubr.f32.gmra.mrb[0].mxu0 %v41
  %v245 = vpop.f32.mrb[0].mxu0
  %v246 = vadd.f32 %v98, %v245
  %v247 = vpop.f32.mrb[0].mxu0
  %248 = vmatprep.mubr.f32.mxu0 %v45
  %249 = vmatmul.mubr.f32.gmra.mrb[0].mxu0 %v44
  %v250 = vpop.f32.mrb[0].mxu0
  %v251 = vadd.f32 %v99, %v250
  %v252 = vpop.f32.mrb[0].mxu0
  %253 = vdwg.mxu0
  %254 = vmatprep.subr.mxu0 0.0
  %255 = vmatpush1.msra.mxu0 %v79
  %256 = vmatprep.subr.mxu0 0.0
  %257 = vmatpush1.msra.mxu0 %v80
  %258 = vmatprep.subr.mxu0 0.0
  %259 = vmatpush1.msra.mxu0 %v81
  %260 = vmatprep.subr.mxu0 0.0
  %261 = vmatpush1.msra.mxu0 %v82
  %262 = vmatprep.subr.mxu0 0.0
  %263 = vmatpush1.msra.mxu0 %v83
  %264 = vmatprep.subr.mxu0 0.0
  %265 = vmatpush1.msra.mxu0 %v84
  %266 = vmatprep.subr.mxu0 0.0
  %267 = vmatpush1.msra.mxu0 %v85
  %268 = vmatprep.subr.mxu0 0.0
  %269 = vmatpush1.msra.mxu0 %v86
  %270 = vmatprep.subr.mxu0 0.0
  %271 = vmatpush1.msra.mxu0 %v87
  %272 = vmatprep.subr.mxu0 0.0
  %273 = vmatpush1.msra.mxu0 %v88
  %274 = vmatprep.subr.mxu0 0.0
  %275 = vmatpush1.msra.mxu0 0.0
  %276 = vmatprep.subr.mxu0 0.0
  %277 = vmatpush1.msra.mxu0 0.0
  %278 = vmatprep.subr.mxu0 0.0
  %279 = vmatpush1.msra.mxu0 0.0
  %280 = vmatprep.subr.mxu0 0.0
  %281 = vmatpush1.msra.mxu0 0.0
  %282 = vmatprep.subr.mxu0 0.0
  %283 = vmatpush1.msra.mxu0 0.0
  %284 = vmatprep.subr.mxu0 0.0
  %285 = vmatpush1.msra.mxu0 0.0
  %286 = vmatprep.subr.mxu0 0.0
  %287 = vmatpush1.msra.mxu0 0.0
  %288 = vmatprep.subr.mxu0 0.0
  %289 = vmatpush1.msra.mxu0 0.0
  %290 = vmatprep.subr.mxu0 0.0
  %291 = vmatpush1.msra.mxu0 0.0
  %292 = vmatprep.subr.mxu0 0.0
  %293 = vmatpush1.msra.mxu0 0.0
  %294 = vmatprep.subr.mxu0 0.0
  %295 = vmatpush1.msra.mxu0 0.0
  %296 = vmatprep.subr.mxu0 0.0
  %297 = vmatpush1.msra.mxu0 0.0
  %298 = vmatprep.subr.mxu0 0.0
  %299 = vmatpush1.msra.mxu0 0.0
  %300 = vmatprep.subr.mxu0 0.0
  %301 = vmatpush1.msra.mxu0 0.0
  %302 = vmatprep.subr.mxu0 0.0
  %303 = vmatpush1.msra.mxu0 0.0
  %304 = vmatprep.subr.mxu0 0.0
  %305 = vmatpush1.msra.mxu0 0.0
  %306 = vmatprep.subr.mxu0 0.0
  %307 = vmatpush1.msra.mxu0 0.0
  %308 = vmatprep.subr.mxu0 0.0
  %309 = vmatpush1.msra.mxu0 0.0
  %310 = vmatprep.subr.mxu0 0.0
  %311 = vmatpush1.msra.mxu0 0.0
  %312 = vmatprep.subr.mxu0 0.0
  %313 = vmatpush1.msra.mxu0 0.0
  %314 = vmatprep.subr.mxu0 0.0
  %315 = vmatpush1.msra.mxu0 0.0
  %316 = vmatprep.subr.mxu0 0.0
  %317 = vmatpush1.msra.mxu0 0.0
  %318 = vmatprep.mubr.f32.mxu0 0.0
  %319 = vmatmul.mubr.f32.gmra.mrb[0].mxu0 %v102
  %v320 = vpop.f32.mrb[0].mxu0
  %v321 = vadd.f32 %v201, %v320
  %v322 = vpop.f32.mrb[0].mxu0
  %323 = vmatprep.mubr.f32.mxu0 0.0
  %324 = vmatmul.mubr.f32.gmra.mrb[0].mxu0 %v105
  %v325 = vpop.f32.mrb[0].mxu0
  %v326 = vadd.f32 %v206, %v325
  %v327 = vpop.f32.mrb[0].mxu0
  %328 = vmatprep.mubr.f32.mxu0 0.0
  %329 = vmatmul.mubr.f32.gmra.mrb[0].mxu0 %v108
  %v330 = vpop.f32.mrb[0].mxu0
  %v331 = vadd.f32 %v211, %v330
  %v332 = vpop.f32.mrb[0].mxu0
  %333 = vmatprep.mubr.f32.mxu0 0.0
  %334 = vmatmul.mubr.f32.gmra.mrb[0].mxu0 %v111
  %v335 = vpop.f32.mrb[0].mxu0
  %v336 = vadd.f32 %v216, %v335
  %v337 = vpop.f32.mrb[0].mxu0
  %338 = vmatprep.mubr.f32.mxu0 0.0
  %339 = vmatmul.mubr.f32.gmra.mrb[0].mxu0 %v114
  %v340 = vpop.f32.mrb[0].mxu0
  %v341 = vadd.f32 %v221, %v340
  %v342 = vpop.f32.mrb[0].mxu0
  %343 = vmatprep.mubr.f32.mxu0 0.0
  %344 = vmatmul.mubr.f32.gmra.mrb[0].mxu0 %v117
  %v345 = vpop.f32.mrb[0].mxu0
  %v346 = vadd.f32 %v226, %v345
  %v347 = vpop.f32.mrb[0].mxu0
  %348 = vmatprep.mubr.f32.mxu0 0.0
  %349 = vmatmul.mubr.f32.gmra.mrb[0].mxu0 %v120
  %v350 = vpop.f32.mrb[0].mxu0
  %v351 = vadd.f32 %v231, %v350
  %v352 = vpop.f32.mrb[0].mxu0
  %353 = vmatprep.mubr.f32.mxu0 0.0
  %354 = vmatmul.mubr.f32.gmra.mrb[0].mxu0 %v123
  %v355 = vpop.f32.mrb[0].mxu0
  %v356 = vadd.f32 %v236, %v355
  %v357 = vpop.f32.mrb[0].mxu0
  %358 = vmatprep.mubr.f32.mxu0 0.0
  %359 = vmatmul.mubr.f32.gmra.mrb[0].mxu0 %v126
  %v360 = vpop.f32.mrb[0].mxu0
  %v361 = vadd.f32 %v241, %v360
  %v362 = vpop.f32.mrb[0].mxu0
  %363 = vmatprep.mubr.f32.mxu0 0.0
  %364 = vmatmul.mubr.f32.gmra.mrb[0].mxu0 %v129
  %v365 = vpop.f32.mrb[0].mxu0
  %v366 = vadd.f32 %v246, %v365
  %v367 = vpop.f32.mrb[0].mxu0
  %368 = vmatprep.mubr.f32.mxu0 0.0
  %369 = vmatmul.mubr.f32.gmra.mrb[0].mxu0 %v132
  %v370 = vpop.f32.mrb[0].mxu0
  %v371 = vadd.f32 %v251, %v370
  %v372 = vpop.f32.mrb[0].mxu0
  %373 = vdwg.mxu0
  %v374 = vmax.f32 %v321, 0.0
  %v375 = vmax.f32 %v326, 0.0
  %v376 = vmax.f32 %v331, 0.0
  %v377 = vmax.f32 %v336, 0.0
  %v378 = vmax.f32 %v341, 0.0
  %v379 = vmax.f32 %v346, 0.0
  %v380 = vmax.f32 %v351, 0.0
  %v381 = vmax.f32 %v356, 0.0
  %v382 = vmax.f32 %v361, 0.0
  %v383 = vmax.f32 %v366, 0.0
  %v384 = vmax.f32 %v371, 0.0
  %vm385 = vcmask 7168
  %386 = vst.msk [vmem:[%s3] sm:$0xff] %vm385, %v374
  %387 = vst.msk [vmem:[%s3 + $0x8] sm:$0xff] %vm385, %v375
  %388 = vst.msk [vmem:[%s3 + $0x10] sm:$0xff] %vm385, %v376
  %389 = vst.msk [vmem:[%s3 + $0x18] sm:$0xff] %vm385, %v377
  %390 = vst.msk [vmem:[%s3 + $0x20] sm:$0xff] %vm385, %v378
  %391 = vst.msk [vmem:[%s3 + $0x28] sm:$0xff] %vm385, %v379
  %392 = vst.msk [vmem:[%s3 + $0x30] sm:$0xff] %vm385, %v380
  %393 = vst.msk [vmem:[%s3 + $0x38] sm:$0xff] %vm385, %v381
  %394 = vst.msk [vmem:[%s3 + $0x40] sm:$0xff] %vm385, %v382
  %395 = vst.msk [vmem:[%s3 + $0x48] sm:$0xff] %vm385, %v383
  %vm396 = vcmask 3072
  %397 = vst.msk [vmem:[%s3 + $0x50] sm:$0xf] %vm396, %v384
  // Predicated region
  $region14: #{tpu_custom_call.1} parent=0 // pred_check
    _
  $region15: #{tpu_custom_call.1} parent=0 // pred_check_branch
    %399 = sbr.rel (0) target = $region17
  $region16: #{tpu_custom_call.1} parent=0 // pred_region
    _
  $region17: #{tpu_custom_call.1} parent=0 // pred_fallthru
    _
  // Predicated region
  $region18: #{tpu_custom_call.1} parent=0 // pred_check
    _
  $region19: #{tpu_custom_call.1} parent=0 // pred_check_branch
    %401 = sbr.rel (0) target = $region21
  $region20: #{tpu_custom_call.1} parent=0 // pred_region
    _
  $region21: #{tpu_custom_call.1} parent=0 // pred_fallthru
    _

</llo_original>
